<compile_context>
chip_gen: v7x
topology: tpu7x:2x2x1
jax: 0.10.0
libtpu: 0.0.40
codegen_flags: <defaults>
</compile_context>

<pallas_src>
import jax
import jax.numpy as jnp
from jax.experimental import pallas as pl
from jax.experimental.pallas import tpu as pltpu


_LANE = 128
_SUBLANE = 8


def _round_up(x, m):
    return ((x + m - 1) // m) * m


def _vmem_capacity_bytes():
    """Physical per-core VMEM, with a conservative (v7x) fallback."""
    try:
        info = pltpu.get_tpu_info()
        cap = getattr(info, "vmem_capacity_bytes", None)
        if cap:
            return int(cap)
    except Exception:
        pass
    return 64 * 1024 * 1024  # v7x per-TensorCore VMEM (smallest generation)


def _choose_tiles(N, F_pad, in_pad, budget, max_rows=1024, max_f=None):
    """Pick (row_tile TM, feature_tile TF) so ALL VMEM residents fit `budget`.

    Residents (bytes):
      feat : 2 * N * in_pad * 2     (double-buffered, bf16)
      W    : 2 * in_pad * TF * 2    (double-buffered, bf16)
      h    : N * TF * 2             (bf16 scratch, single copy)
      bias : 2 * TF * 4
      adj  : 2 * TM * N * 2         (double-buffered, bf16)   } per-row terms
      out  : 2 * TM * TF * 4        (double-buffered, f32)    }
    """
    f_units = F_pad // _LANE
    max_f_units = f_units if max_f is None else max(1, min(f_units, max_f // _LANE))
    tf_cands = [u * _LANE for u in range(max_f_units, 0, -1) if f_units % u == 0]
    for tf in tf_cands:
        fixed = (2 * N * in_pad * 2 + 2 * in_pad * tf * 2
                 + N * tf * 2 + 2 * tf * 4)
        per_row = 2 * N * 2 + 2 * tf * 4
        if budget <= fixed:
            continue  # h / feat residency too big for this TF -> shrink TF
        rows = (budget - fixed) // per_row
        tm = min(N, max_rows, (rows // _SUBLANE) * _SUBLANE)
        if tm >= min(N, _SUBLANE):
            return (N if tm >= N else tm), tf
    # Last resort for extreme shapes: smallest legal tiles (compiler may spill).
    return min(N, _SUBLANE), _LANE


def _gcn_kernel(feat_ref, w_ref, adj_ref, bias_ref, alpha_ref, out_ref, h_ref):
    # feat_ref : (1, N, in_pad)  bf16   resident across f, r (index only on b)
    # w_ref    : (in_pad, TF)    bf16
    # adj_ref  : (1, TM, N)      bf16   row tile of this batch's adjacency
    # bias_ref : (1, TF)         f32
    # alpha_ref: (1, 1)          f32    SMEM (shared PReLU slope)
    # out_ref  : (1, TM, TF)     f32
    # h_ref    : (N, TF)         bf16   VMEM scratch, written once at r == 0
    @pl.when(pl.program_id(2) == 0)
    def _():
        # Fused projection for this (batch, F-tile): h = feat @ W  (f32 acc).
        h = jnp.dot(feat_ref[0], w_ref[...], preferred_element_type=jnp.float32)
        h_ref[...] = h.astype(jnp.bfloat16)

    # Row-tiled aggregation: out = adj_rows @ h  (bf16 x bf16 -> f32 acc).
    o = jnp.dot(adj_ref[0], h_ref[...], preferred_element_type=jnp.float32)
    o = o + bias_ref[...]
    a = alpha_ref[0, 0]
    out_ref[0] = jnp.where(o > 0, o, a * o)   # PReLU, f32 epilogue


def _gcn_fused(feat_b, w_b, adj_b, bias_p, alpha, tm, tf, vmem_limit):
    B, N, in_pad = feat_b.shape
    F_pad = w_b.shape[1]
    nf = F_pad // tf
    nr = pl.cdiv(N, tm)

    bias2d = bias_p.reshape(1, F_pad)
    alpha2d = jnp.asarray(alpha, jnp.float32).reshape(1, 1)

    flops = 2 * B * N * in_pad * F_pad + 2 * B * N * N * F_pad
    bytes_accessed = (2 * B * N * in_pad          # feat (bf16)
                      + 2 * in_pad * F_pad        # W    (bf16)
                      + 2 * B * N * N * nf        # adj  (bf16, re-read per F tile)
                      + 4 * B * N * F_pad         # out  (f32)
                      + 4 * F_pad)                # bias

    return pl.pallas_call(
        _gcn_kernel,
        out_shape=jax.ShapeDtypeStruct((B, N, F_pad), jnp.float32),
        grid_spec=pltpu.PrefetchScalarGridSpec(
            num_scalar_prefetch=0,
            grid=(B, nf, nr),
            in_specs=[
                pl.BlockSpec((1, N, in_pad), lambda b, f, r: (b, 0, 0)),
                pl.BlockSpec((in_pad, tf), lambda b, f, r: (0, f)),
                pl.BlockSpec((1, tm, N), lambda b, f, r: (b, r, 0)),
                pl.BlockSpec((1, tf), lambda b, f, r: (0, f)),
                pl.BlockSpec(memory_space=pltpu.MemorySpace.SMEM),
            ],
            out_specs=pl.BlockSpec((1, tm, tf), lambda b, f, r: (b, r, f)),
            scratch_shapes=[pltpu.VMEM((N, tf), jnp.bfloat16)],
        ),
        compiler_params=pltpu.CompilerParams(
            # Megacore shards on batches only: the f/r axes reuse the per-core
            # h scratch (written at r == 0) and sharding them would duplicate
            # the dominant adj/feat HBM streams across cores.
            dimension_semantics=("parallel", "arbitrary", "arbitrary"),
            vmem_limit_bytes=vmem_limit,
        ),
        cost_estimate=pl.CostEstimate(
            flops=flops, transcendentals=0, bytes_accessed=bytes_accessed),
    )(feat_b, w_b, adj_b, bias2d, alpha2d)


def gcn_layer(feat, adj, w, bias, alpha, *, unpad_output=True,
              _max_row_tile=1024, _max_f_tile=None):
    """GCNLayer forward: PReLU(bmm(adj, feat @ W) + bias).

    feat: (B, N, in_ft), adj: (B, N, N), w: (in_ft, out_ft) (already W^T vs.
    torch's (out, in) layout), bias: (out_ft,), alpha: scalar PReLU slope.

    Matmul inputs run in bf16 with f32 accumulation/epilogue.  Pass adj as
    bf16 (or reuse the same cast array across layers) to avoid repeating the
    one-time cast below.  Set unpad_output=False to keep the lane-padded
    (B, N, F_pad) slab and skip the post-kernel slice copy when
    out_ft % 128 != 0.
    """
    B, N, in_ft = feat.shape
    out_ft = w.shape[1]
    in_pad = _round_up(in_ft, _LANE)
    F_pad = _round_up(out_ft, _LANE)

    feat_b = feat.astype(jnp.bfloat16)
    w_b = w.astype(jnp.bfloat16)
    if in_pad != in_ft:
        feat_b = jnp.pad(feat_b, ((0, 0), (0, 0), (0, in_pad - in_ft)))
        w_b = jnp.pad(w_b, ((0, in_pad - in_ft), (0, 0)))
    if F_pad != out_ft:
        w_b = jnp.pad(w_b, ((0, 0), (0, F_pad - out_ft)))
        bias_p = jnp.pad(bias.astype(jnp.float32), (0, F_pad - out_ft))
    else:
        bias_p = bias.astype(jnp.float32)

    adj_b = adj if adj.dtype == jnp.bfloat16 else adj.astype(jnp.bfloat16)

    cap = _vmem_capacity_bytes()
    budget = (cap * 3) // 4          # ~75% of physical VMEM for our residents
    vmem_limit = (cap * 17) // 20    # ~85%: headroom for Mosaic internal scratch

    tm, tf = _choose_tiles(N, F_pad, in_pad, budget,
                           max_rows=_max_row_tile, max_f=_max_f_tile)

    out_pad = _gcn_fused(feat_b, w_b, adj_b, bias_p, alpha, tm, tf, vmem_limit)

    if unpad_output and F_pad != out_ft:
        return out_pad[..., :out_ft]
    return out_pad


# ------------------------------ references -----------------------------------
def _reference_bf16(feat, adj, w, bias, alpha):
    # Matches the kernel's numerics: bf16 matmul inputs, f32 accumulation.
    h = jnp.dot(feat.astype(jnp.bfloat16), w.astype(jnp.bfloat16),
                preferred_element_type=jnp.float32)
    out = jnp.einsum("bnm,bmf->bnf", adj.astype(jnp.bfloat16),
                     h.astype(jnp.bfloat16),
                     preferred_element_type=jnp.float32) + bias
    return jnp.where(out > 0, out, alpha * out)


def _reference_f32(feat, adj, w, bias, alpha):
    out = jnp.einsum("bnm,bmf->bnf", adj, feat @ w) + bias
    return jnp.where(out > 0, out, alpha * out)


def _xavier_uniform_t(key, out_ft, in_ft):
    # torch.nn.init.xavier_uniform_ on a (out_ft, in_ft) weight, transposed
    # so the kernel computes feat @ W^T as feat @ w.
    limit = (6.0 / (in_ft + out_ft)) ** 0.5
    w_torch = jax.random.uniform(key, (out_ft, in_ft), jnp.float32,
                                 minval=-limit, maxval=limit)
    return w_torch.T


if __name__ == "__main__":
    # --- primary demo (small shapes consistent with the module) --------------
    B, N, in_ft, out_ft = 2, 8, 16, 32

    key = jax.random.PRNGKey(0)
    k_feat, k_adj, k_w, k_bias = jax.random.split(key, 4)

    feat = jax.random.normal(k_feat, (B, N, in_ft), jnp.float32)
    adj = jax.random.uniform(k_adj, (B, N, N), jnp.float32)
    w = _xavier_uniform_t(k_w, out_ft, in_ft)            # (in_ft, out_ft)
    # Module init fills bias with 0; use a nonzero value so the bias-add path
    # is exercised (any value is a valid trained parameter).
    bias = 0.1 * jax.random.normal(k_bias, (out_ft,), jnp.float32)
    alpha = jnp.float32(0.25)                            # nn.PReLU default slope

    out = gcn_layer(feat, adj, w, bias, alpha)
    jax.block_until_ready(out)

    ref_b = _reference_bf16(feat, adj, w, bias, alpha)
    ref_f = _reference_f32(feat, adj, w, bias, alpha)
    assert out.shape == ref_b.shape
    assert jnp.allclose(out, ref_b, atol=2e-2, rtol=2e-2), (
        float(jnp.max(jnp.abs(out - ref_b))))
    assert jnp.allclose(out, ref_f, atol=1e-1, rtol=1e-1), (
        float(jnp.max(jnp.abs(out - ref_f))))

    # --- second config: exercises the row-tile loop (r > 0) and F tiling -----
    B2, N2, in2, out2 = 2, 24, 16, 256
    k2 = jax.random.PRNGKey(1)
    kf2, ka2, kw2, kb2 = jax.random.split(k2, 4)
    feat2 = jax.random.normal(kf2, (B2, N2, in2), jnp.float32)
    adj2 = jax.random.uniform(ka2, (B2, N2, N2), jnp.float32)
    w2 = _xavier_uniform_t(kw2, out2, in2)
    bias2 = 0.1 * jax.random.normal(kb2, (out2,), jnp.float32)

    out2_arr = gcn_layer(feat2, adj2, w2, bias2, alpha,
                         _max_row_tile=8, _max_f_tile=128)
    jax.block_until_ready(out2_arr)
    ref2 = _reference_bf16(feat2, adj2, w2, bias2, alpha)
    assert out2_arr.shape == ref2.shape
    assert jnp.allclose(out2_arr, ref2, atol=2e-2, rtol=2e-2), (
        float(jnp.max(jnp.abs(out2_arr - ref2))))

    print("KERNEL_OK")
</pallas_src>

<mosaic_0001>
module attributes {stable_mosaic.version = 11 : i64} {
  func.func @_gcn_kernel(%arg0: i32, %arg1: i32, %arg2: i32, %arg3: memref<1x8x128xbf16, #tpu.memory_space<vmem>>, %arg4: memref<128x128xbf16, #tpu.memory_space<vmem>>, %arg5: memref<1x8x8xbf16, #tpu.memory_space<vmem>>, %arg6: memref<1x128xf32, #tpu.memory_space<vmem>>, %arg7: memref<1x1xf32, #tpu.memory_space<smem>>, %arg8: memref<1x8x128xf32, #tpu.memory_space<vmem>>, %arg9: memref<8x128xbf16, #tpu.memory_space<vmem>>) attributes {dimension_semantics = [#tpu.dimension_semantics<parallel>, #tpu.dimension_semantics<arbitrary>, #tpu.dimension_semantics<arbitrary>], iteration_bounds = array<i64: 2, 1, 1>, scalar_prefetch = 0 : i64, scratch_operands = 1 : i64, tpu.core_type = #tpu.core_type<tc>, window_params = [{transform_indices = @transform_0, window_bounds = array<i64: 1, 8, 128>}, {transform_indices = @transform_1, window_bounds = array<i64: 128, 128>}, {transform_indices = @transform_2, window_bounds = array<i64: 1, 8, 8>}, {transform_indices = @transform_3, window_bounds = array<i64: 1, 128>}, {transform_indices = @transform_4, window_bounds = array<i64: 1, 1>}, {transform_indices = @transform_5, window_bounds = array<i64: 1, 8, 128>}]} {
    %c0_i32 = arith.constant 0 : i32
    %0 = arith.cmpi eq, %arg2, %c0_i32 : i32
    %1 = arith.extui %0 : i1 to i32
    %c0_i32_0 = arith.constant 0 : i32
    %2 = arith.cmpi ne, %1, %c0_i32_0 : i32
    scf.if %2 {
      %c0_13 = arith.constant 0 : index
      %c0_14 = arith.constant 0 : index
      %c0_15 = arith.constant 0 : index
      %19 = vector.load %arg3[%c0_13, %c0_14, %c0_15] : memref<1x8x128xbf16, #tpu.memory_space<vmem>>, vector<1x8x128xbf16>
      %20 = vector.shape_cast %19 : vector<1x8x128xbf16> to vector<8x128xbf16>
      %c0_16 = arith.constant 0 : index
      %c0_17 = arith.constant 0 : index
      %21 = vector.load %arg4[%c0_16, %c0_17] : memref<128x128xbf16, #tpu.memory_space<vmem>>, vector<128x128xbf16>
      %cst_18 = arith.constant dense<0.000000e+00> : vector<8x128xf32>
      %22 = tpu.matmul %20, %21, %cst_18 {dimension_numbers = #tpu.dot_dimension_numbers<[1], [0], [0], [1], [0, 0, 1, 1], [], []>} : vector<8x128xbf16>, vector<128x128xbf16>, vector<8x128xf32> -> vector<8x128xf32>
      %23 = arith.truncf %22 : vector<8x128xf32> to vector<8x128xbf16>
      %c0_19 = arith.constant 0 : index
      %c0_20 = arith.constant 0 : index
      %24 = vector.load %arg9[%c0_19, %c0_20] : memref<8x128xbf16, #tpu.memory_space<vmem>>, vector<8x128xbf16>
      tpu.vector_store %arg9[%c0_19, %c0_20], %23 {strides = array<i32>} : memref<8x128xbf16, #tpu.memory_space<vmem>>, vector<8x128xbf16>,
    } else {
    }
    %c0 = arith.constant 0 : index
    %c0_1 = arith.constant 0 : index
    %c0_2 = arith.constant 0 : index
    %3 = vector.load %arg5[%c0, %c0_1, %c0_2] : memref<1x8x8xbf16, #tpu.memory_space<vmem>>, vector<1x8x8xbf16>
    %4 = vector.shape_cast %3 : vector<1x8x8xbf16> to vector<8x8xbf16>
    %c0_3 = arith.constant 0 : index
    %c0_4 = arith.constant 0 : index
    %5 = vector.load %arg9[%c0_3, %c0_4] : memref<8x128xbf16, #tpu.memory_space<vmem>>, vector<8x128xbf16>
    %cst = arith.constant dense<0.000000e+00> : vector<8x128xf32>
    %6 = tpu.matmul %4, %5, %cst {dimension_numbers = #tpu.dot_dimension_numbers<[1], [0], [0], [1], [0, 0, 1, 1], [], []>} : vector<8x8xbf16>, vector<8x128xbf16>, vector<8x128xf32> -> vector<8x128xf32>
    %c0_5 = arith.constant 0 : index
    %c0_6 = arith.constant 0 : index
    %7 = vector.load %arg6[%c0_5, %c0_6] : memref<1x128xf32, #tpu.memory_space<vmem>>, vector<1x128xf32>
    %8 = vector.broadcast %7 : vector<1x128xf32> to vector<8x128xf32>
    %9 = arith.addf %6, %8 : vector<8x128xf32>
    %c0_7 = arith.constant 0 : index
    %c0_8 = arith.constant 0 : index
    %10 = memref.load %arg7[%c0_7, %c0_8] : memref<1x1xf32, #tpu.memory_space<smem>>
    %cst_9 = arith.constant 0.000000e+00 : f32
    %11 = vector.broadcast %cst_9 : f32 to vector<8x128xf32>
    %12 = arith.cmpf ogt, %9, %11 : vector<8x128xf32>
    %13 = vector.broadcast %10 : f32 to vector<8x128xf32>
    %14 = arith.mulf %13, %9 : vector<8x128xf32>
    %15 = arith.select %12, %9, %14 : vector<8x128xi1>, vector<8x128xf32>
    %c0_10 = arith.constant 0 : index
    %c0_11 = arith.constant 0 : index
    %c0_12 = arith.constant 0 : index
    %16 = vector.load %arg8[%c0_10, %c0_11, %c0_12] : memref<1x8x128xf32, #tpu.memory_space<vmem>>, vector<1x8x128xf32>
    %17 = vector.shape_cast %16 : vector<1x8x128xf32> to vector<8x128xf32>
    %18 = vector.shape_cast %15 : vector<8x128xf32> to vector<1x8x128xf32>
    tpu.vector_store %arg8[%c0_10, %c0_11, %c0_12], %18 {strides = array<i32>} : memref<1x8x128xf32, #tpu.memory_space<vmem>>, vector<1x8x128xf32>,
    return
  }
  func.func @transform_0(%arg0: i32, %arg1: i32, %arg2: i32) -> (i32, i32, i32) {
    %c0_i32 = arith.constant 0 : i32
    %c0_i32_0 = arith.constant 0 : i32
    %c0_i32_1 = arith.constant 0 : i32
    return %arg0, %c0_i32, %c0_i32_0 : i32, i32, i32
  }
  func.func @transform_1(%arg0: i32, %arg1: i32, %arg2: i32) -> (i32, i32) {
    %c0_i32 = arith.constant 0 : i32
    %c0_i32_0 = arith.constant 0 : i32
    return %c0_i32, %arg1 : i32, i32
  }
  func.func @transform_2(%arg0: i32, %arg1: i32, %arg2: i32) -> (i32, i32, i32) {
    %c0_i32 = arith.constant 0 : i32
    %c0_i32_0 = arith.constant 0 : i32
    return %arg0, %arg2, %c0_i32 : i32, i32, i32
  }
  func.func @transform_3(%arg0: i32, %arg1: i32, %arg2: i32) -> (i32, i32) {
    %c0_i32 = arith.constant 0 : i32
    %c0_i32_0 = arith.constant 0 : i32
    return %c0_i32, %arg1 : i32, i32
  }
  func.func @transform_4(%arg0: i32, %arg1: i32, %arg2: i32) -> (i32, i32) {
    %c0_i32 = arith.constant 0 : i32
    %c0_i32_0 = arith.constant 0 : i32
    %c0_i32_1 = arith.constant 0 : i32
    return %c0_i32, %c0_i32_0 : i32, i32
  }
  func.func @transform_5(%arg0: i32, %arg1: i32, %arg2: i32) -> (i32, i32, i32) {
    %c0_i32 = arith.constant 0 : i32
    return %arg0, %arg2, %arg1 : i32, i32, i32
  }
}

</mosaic_0001>

<llo_original>
// kernel: tpu_custom_call.1
$region0: #{tpu_custom_call.1}
  #allocation0 [shape = 'u32[]', space=smem, size = 0x4, offset = 0x4, fixed_abs, tag = 'smem constant byte address 0x4 - core index']
  #allocation1 [shape = 'u32[144,128]{1,0:T(1,128)}', space=vmem, size = 0x12000, scoped, tag = 'internal scratch']
  #allocation2 [shape = 'bf16[8,128]{1,0:T(8,128)(2,1)}', space=vmem, size = 0x800, scoped, tag = 'scratch operand']
  #allocation3 [shape = 'f32[1,1]{1,0:T(1,128)S(6)}', space=smem, size = 0x200, scoped, tag = 'scoped memory for tpu_custom_call.1']
  %s0 = inlined_call_operand.hbm [shape: bf16[2,8,128], index: 0, kind: input, shape index: {}]
  %s1 = inlined_call_operand.hbm [shape: bf16[128,128], index: 1, kind: input, shape index: {}]
  %s2 = inlined_call_operand.vmem [shape: bf16[2,8,8], index: 2, kind: input, shape index: {}]
  %s3 = inlined_call_operand.vmem [shape: f32[1,128], index: 3, kind: input, shape index: {}]
  %s4 = inlined_call_operand.<no memory space> [shape: f32[1,1], index: 4, kind: input, shape index: {}]
  %s5 = inlined_call_operand.hbm [shape: f32[2,8,128], index: 5, kind: output, shape index: {}]
  %s6 = sld [smem:[#allocation0]]
  $region65: #{tpu_custom_call.1} parent=0
    _
  %s8 = ssub.s32 1, %s6
  %s9 = scalar_select 0, %s8, %s6
  %10 = sst [smem:[#allocation3]] %s4
  $region1: #{tpu_custom_call.1} parent=0
    #allocation4 [shape = 'u8[4096]{0}', space=vmem, size = 0x1000, scoped, tag = 'input window, operand 0']
    #allocation5 [shape = 's32[2]{0}', space=sflag, size = 0x8, scoped, tag = 'scoped memory for tpu_custom_call.1']
    #allocation6 [shape = 's32[2]{0}', space=sflag, size = 0x8, scoped, tag = 'scoped memory for tpu_custom_call.1']
    #allocation7 [shape = 'u8[32768]{0}', space=vmem, size = 0x8000, scoped, tag = 'input window, operand 1, single buffered']
    #allocation8 [shape = 's32[1]{0}', space=sflag, size = 0x4, scoped, tag = 'scoped memory for tpu_custom_call.1']
    #allocation9 [shape = 'u8[8192]{0}', space=vmem, size = 0x2000, scoped, tag = 'output window, operand 0']
    %11 = vsyncpa [#allocation5], 0
    %s12 = scalar_lea.sflag [#allocation5], 1
    %13 = vsyncpa %s12, 0
    %14 = vsyncpa [#allocation8], 0
    %15 = vsyncpa [#allocation6], 0
    %s16 = scalar_lea.sflag [#allocation6], 1
    %17 = vsyncpa %s16, 0
    loop: start=0, step=1, limit=4
    $region2: #{tpu_custom_call.1} parent=1 // loop_pre_header
      _
    $region3: #{tpu_custom_call.1} parent=1 // loop_header
      %s19 = sphi 0, %s23
      %p20 = scmp.ge.s32.totalorder %s19, 4
      %s26 = sphi 0, %s45
      %s27 = sphi 0, %s41
      %s28 = sphi 0, %s37
      %s29 = sphi 0, %s26
      %s30 = sphi 0, %s27
      %s31 = sphi 0, %s28
      %s32 = sphi 0, %s29
      %s33 = sphi 0, %s30
      %s34 = sphi 0, %s31
      %s48 = sphi 0, %s50
      %s51 = sphi 0, %s48
      %s52 = sphi 0, %s51
      %s68 = sphi 0, %s52
      %s74 = sphi 0, %s76
      %s77 = sphi 0, %s74
      %s78 = sphi 0, %s77
      %s94 = sphi 0, %s78
      %s102 = sphi 0, %s104
      %s105 = sphi 0, %s102
      %s106 = sphi 0, %s105
      %s122 = sphi 0, %s106
      %s128 = sphi 0, %s130
      %s131 = sphi 0, %s128
      %s132 = sphi 0, %s131
      %s148 = sphi 0, %s132
      %s152 = sphi 0, %s152
      %s154 = sphi 0, %s152
      %s155 = sphi 0, %s154
      %s169 = sphi 0, %s155
      %s179 = sphi 0, %s181
      %s182 = sphi 0, %s179
      %s183 = sphi 0, %s182
      %s199 = sphi 0, %s183
    $region4: #{tpu_custom_call.1} parent=1 // loop_header_branch
      %22 = sbr.rel (%p20) target = $region8
    $region5: #{tpu_custom_call.1} parent=1 // loop_body
      %s24 = ssub.s32 %s19, 1
      %s25 = ssub.s32 %s19, 2
      %s35 = sadd.s32 1, %s28
      %p36 = scmp.ge.s32.totalorder %s35, 1
      %s37 = scalar_select %p36, 0, %s35
      %s38 = sadd.s32 1, %s27
      %s39 = scalar_select %p36, %s38, %s27
      %p40 = scmp.ge.s32.totalorder %s39, 1
      %s41 = scalar_select %p40, 0, %s39
      %s42 = sadd.s32 1, %s26
      %s43 = scalar_select %p40, %s42, %s26
      %p44 = scmp.ge.s32.totalorder %s43, 2
      %s45 = scalar_select %p44, 0, %s43
      %s46 = ssub.s32 %s26, %s45
      %p47 = scmp.eq.s32.totalorder %s46, 0
      %s49 = sadd.s32 %s48, 1
      %s50 = scalar_select %p47, %s48, %s49
      %p53 = pneg %p47
      %p54 = scmp.eq.s32.totalorder %s19, 1
      %p55 = por %p53, %p54
      %p56 = scmp.ne.s32.totalorder %s48, %s51
      %p57 = scmp.eq.s32.totalorder %s19, 0
      %p58 = por %p56, %p57
      %p59 = scmp.ne.s32.totalorder %s48, %s51
      %p60 = scmp.eq.s32.totalorder %s24, 1
      %p61 = por %p59, %p60
      %p62 = scmp.ne.s32.totalorder %s51, %s52
      %p63 = scmp.eq.s32.totalorder %s24, 0
      %p64 = por %p62, %p63
      %p65 = scmp.ne.s32.totalorder %s51, %s52
      %p66 = scmp.eq.s32.totalorder %s25, 1
      %p67 = por %p65, %p66
      %p69 = scmp.ne.s32.totalorder %s52, %s68
      %p70 = scmp.eq.s32.totalorder %s25, 0
      %p71 = por %p69, %p70
      %s72 = ssub.s32 %s27, %s41
      %p73 = scmp.eq.s32.totalorder %s72, 0
      %s75 = sadd.s32 %s74, 1
      %s76 = scalar_select %p73, %s74, %s75
      %p79 = pneg %p73
      %p80 = scmp.eq.s32.totalorder %s19, 1
      %p81 = por %p79, %p80
      %p82 = scmp.ne.s32.totalorder %s74, %s77
      %p83 = scmp.eq.s32.totalorder %s19, 0
      %p84 = por %p82, %p83
      %p85 = scmp.ne.s32.totalorder %s74, %s77
      %p86 = scmp.eq.s32.totalorder %s24, 1
      %p87 = por %p85, %p86
      %p88 = scmp.ne.s32.totalorder %s77, %s78
      %p89 = scmp.eq.s32.totalorder %s24, 0
      %p90 = por %p88, %p89
      %p91 = scmp.ne.s32.totalorder %s77, %s78
      %p92 = scmp.eq.s32.totalorder %s25, 1
      %p93 = por %p91, %p92
      %p95 = scmp.ne.s32.totalorder %s78, %s94
      %p96 = scmp.eq.s32.totalorder %s25, 0
      %p97 = por %p95, %p96
      %s98 = ssub.s32 %s26, %s45
      %s99 = ssub.s32 %s28, %s37
      %s100 = sor.u32 %s98, %s99
      %p101 = scmp.eq.s32.totalorder %s100, 0
      %s103 = sadd.s32 %s102, 1
      %s104 = scalar_select %p101, %s102, %s103
      %p107 = pneg %p101
      %p108 = scmp.eq.s32.totalorder %s19, 1
      %p109 = por %p107, %p108
      %p110 = scmp.ne.s32.totalorder %s102, %s105
      %p111 = scmp.eq.s32.totalorder %s19, 0
      %p112 = por %p110, %p111
      %p113 = scmp.ne.s32.totalorder %s102, %s105
      %p114 = scmp.eq.s32.totalorder %s24, 1
      %p115 = por %p113, %p114
      %p116 = scmp.ne.s32.totalorder %s105, %s106
      %p117 = scmp.eq.s32.totalorder %s24, 0
      %p118 = por %p116, %p117
      %p119 = scmp.ne.s32.totalorder %s105, %s106
      %p120 = scmp.eq.s32.totalorder %s25, 1
      %p121 = por %p119, %p120
      %p123 = scmp.ne.s32.totalorder %s106, %s122
      %p124 = scmp.eq.s32.totalorder %s25, 0
      %p125 = por %p123, %p124
      %s126 = ssub.s32 %s27, %s41
      %p127 = scmp.eq.s32.totalorder %s126, 0
      %s129 = sadd.s32 %s128, 1
      %s130 = scalar_select %p127, %s128, %s129
      %p133 = pneg %p127
      %p134 = scmp.eq.s32.totalorder %s19, 1
      %p135 = por %p133, %p134
      %p136 = scmp.ne.s32.totalorder %s128, %s131
      %p137 = scmp.eq.s32.totalorder %s19, 0
      %p138 = por %p136, %p137
      %p139 = scmp.ne.s32.totalorder %s128, %s131
      %p140 = scmp.eq.s32.totalorder %s24, 1
      %p141 = por %p139, %p140
      %p142 = scmp.ne.s32.totalorder %s131, %s132
      %p143 = scmp.eq.s32.totalorder %s24, 0
      %p144 = por %p142, %p143
      %p145 = scmp.ne.s32.totalorder %s131, %s132
      %p146 = scmp.eq.s32.totalorder %s25, 1
      %p147 = por %p145, %p146
      %p149 = scmp.ne.s32.totalorder %s132, %s148
      %p150 = scmp.eq.s32.totalorder %s25, 0
      %p151 = por %p149, %p150
      %s153 = sadd.s32 %s152, 1
      %p156 = scmp.eq.s32.totalorder %s19, 1
      %p157 = scmp.ne.s32.totalorder %s152, %s154
      %p158 = scmp.eq.s32.totalorder %s19, 0
      %p159 = por %p157, %p158
      %p160 = scmp.ne.s32.totalorder %s152, %s154
      %p161 = scmp.eq.s32.totalorder %s24, 1
      %p162 = por %p160, %p161
      %p163 = scmp.ne.s32.totalorder %s154, %s155
      %p164 = scmp.eq.s32.totalorder %s24, 0
      %p165 = por %p163, %p164
      %p166 = scmp.ne.s32.totalorder %s154, %s155
      %p167 = scmp.eq.s32.totalorder %s25, 1
      %p168 = por %p166, %p167
      %p170 = scmp.ne.s32.totalorder %s155, %s169
      %p171 = scmp.eq.s32.totalorder %s25, 0
      %p172 = por %p170, %p171
      %s173 = ssub.s32 %s26, %s45
      %s174 = ssub.s32 %s28, %s37
      %s175 = sor.u32 %s173, %s174
      %s176 = ssub.s32 %s27, %s41
      %s177 = sor.u32 %s175, %s176
      %p178 = scmp.eq.s32.totalorder %s177, 0
      %s180 = sadd.s32 %s179, 1
      %s181 = scalar_select %p178, %s179, %s180
      %p184 = pneg %p178
      %p185 = scmp.eq.s32.totalorder %s19, 1
      %p186 = por %p184, %p185
      %p187 = scmp.ne.s32.totalorder %s179, %s182
      %p188 = scmp.eq.s32.totalorder %s19, 0
      %p189 = por %p187, %p188
      %p190 = scmp.ne.s32.totalorder %s179, %s182
      %p191 = scmp.eq.s32.totalorder %s24, 1
      %p192 = por %p190, %p191
      %p193 = scmp.ne.s32.totalorder %s182, %s183
      %p194 = scmp.eq.s32.totalorder %s24, 0
      %p195 = por %p193, %p194
      %p196 = scmp.ne.s32.totalorder %s182, %s183
      %p197 = scmp.eq.s32.totalorder %s25, 1
      %p198 = por %p196, %p197
      %p200 = scmp.ne.s32.totalorder %s183, %s199
      %p201 = scmp.eq.s32.totalorder %s25, 0
      %p202 = por %p200, %p201
      %p203 = scmp.le.s32.totalorder 1, %s19
      %p204 = scmp.lt.s32.totalorder %s19, 3
      %p205 = pnand %p203, %p204
      %p206 = pneg %p205
      // Predicated region
      $region9: #{tpu_custom_call.1} parent=5 // pred_check
        _
      $region10: #{tpu_custom_call.1} parent=5 // pred_check_branch
        %208 = sbr.rel (%p205) target = $region12
      $region11: #{tpu_custom_call.1} parent=5 // pred_region
        %s209 = ssub.s32 %s19, 1
        // Predicated region
        $region13: #{tpu_custom_call.1} parent=11 // pred_check
          %p210 = pneg %p90
        $region14: #{tpu_custom_call.1} parent=11 // pred_check_branch
          %212 = sbr.rel (%p210) target = $region16
        $region15: #{tpu_custom_call.1} parent=11 // pred_region
          %s214 = ssub.s32 1024, 1024
          %215 = vsyncadd [#allocation8], %s214
          %s216 = smul.addr %s30, 64
          %s217 = scalar_lea.hbm %s1, %s216
          %s218 = sshll.u32 [#allocation7], 4
          %s219 = int_to_ptr.vmem [resolvable:$true] %s218
          %224 = dma.hbm_to_vmem [thread:$0]  %s217, 1024, %s219, [#allocation8], 64, 64, 4
        $region16: #{tpu_custom_call.1} parent=11 // pred_fallthru
          _
        // Predicated region
        $region17: #{tpu_custom_call.1} parent=11 // pred_check
          %p225 = pneg %p144
        $region18: #{tpu_custom_call.1} parent=11 // pred_check_branch
          %227 = sbr.rel (%p225) target = $region20
        $region19: #{tpu_custom_call.1} parent=11 // pred_region
          %p228 = scmp.lt.s32.totalorder %s30, 0
          %s229 = scalar_select %p228, %s30, 0
          %s230 = scalar_lea.vmem %s3, %s229
        $region20: #{tpu_custom_call.1} parent=11 // pred_fallthru
          _
        // Predicated region
        $region21: #{tpu_custom_call.1} parent=11 // pred_check
          %p231 = pneg %p165
        $region22: #{tpu_custom_call.1} parent=11 // pred_check_branch
          %233 = sbr.rel (%p231) target = $region24
        $region23: #{tpu_custom_call.1} parent=11 // pred_region
          _
        $region24: #{tpu_custom_call.1} parent=11 // pred_fallthru
          _
      $region12: #{tpu_custom_call.1} parent=5 // pred_fallthru
        _
      %p234 = scmp.lt.s32.totalorder %s19, 2
      // Predicated region
      $region25: #{tpu_custom_call.1} parent=5 // pred_check
        %p235 = pneg %p234
      $region26: #{tpu_custom_call.1} parent=5 // pred_check_branch
        %237 = sbr.rel (%p235) target = $region28
      $region27: #{tpu_custom_call.1} parent=5 // pred_region
        // Predicated region
        $region29: #{tpu_custom_call.1} parent=27 // pred_check
          %p238 = pneg %p58
        $region30: #{tpu_custom_call.1} parent=27 // pred_check_branch
          %240 = sbr.rel (%p238) target = $region32
        $region31: #{tpu_custom_call.1} parent=27 // pred_region
          %s241 = sand.u32 %s48, 1
          %s242 = scalar_lea.sflag [#allocation5], %s241
          %s243 = sand.u32 %s48, 1
          %s244 = smul.addr %s243, 4
          %s245 = scalar_lea.vmem [#allocation4], %s244
          %s247 = ssub.s32 64, 64
          %248 = vsyncadd %s242, %s247
          %s249 = smul.addr %s26, 64
          %s250 = scalar_lea.hbm %s0, %s249
          %s252 = sshll.u32 %s245, 4
          %s253 = int_to_ptr.vmem [resolvable:$true] %s252
          %255 = dma.hbm_to_vmem [thread:$0]  %s250, 64, %s253, %s242
        $region32: #{tpu_custom_call.1} parent=27 // pred_fallthru
          _
        // Predicated region
        $region33: #{tpu_custom_call.1} parent=27 // pred_check
          %p256 = pneg %p112
        $region34: #{tpu_custom_call.1} parent=27 // pred_check_branch
          %258 = sbr.rel (%p256) target = $region36
        $region35: #{tpu_custom_call.1} parent=27 // pred_region
          %p259 = scmp.lt.s32.totalorder %s26, 1
          %s260 = scalar_select %p259, %s26, 1
          %p261 = scmp.lt.s32.totalorder %s28, 0
          %s262 = scalar_select %p261, %s28, 0
          %s263 = sadd.s32 %s262, %s260
          %s264 = smul.addr %s263, 4
          %s265 = scalar_lea.vmem %s2, %s264
        $region36: #{tpu_custom_call.1} parent=27 // pred_fallthru
          _
      $region28: #{tpu_custom_call.1} parent=5 // pred_fallthru
        _
      %p266 = scmp.le.s32.totalorder 1, %s19
      %p267 = scmp.lt.s32.totalorder %s19, 3
      %p268 = pnand %p266, %p267
      %p269 = pneg %p268
      // Predicated region
      $region37: #{tpu_custom_call.1} parent=5 // pred_check
        _
      $region38: #{tpu_custom_call.1} parent=5 // pred_check_branch
        %271 = sbr.rel (%p268) target = $region40
      $region39: #{tpu_custom_call.1} parent=5 // pred_region
        %s272 = ssub.s32 %s19, 1
        %s273 = sand.u32 %s51, 1
        %s274 = scalar_lea.sflag [#allocation5], %s273
        %s275 = sand.u32 %s51, 1
        %s276 = smul.addr %s275, 4
        %s277 = scalar_lea.vmem [#allocation4], %s276
        // Predicated region
        $region41: #{tpu_custom_call.1} parent=39 // pred_check
          %p278 = pneg %p64
        $region42: #{tpu_custom_call.1} parent=39 // pred_check_branch
          %280 = sbr.rel (%p278) target = $region44
        $region43: #{tpu_custom_call.1} parent=39 // pred_region
          %281 = dma.done %s274, 64
        $region44: #{tpu_custom_call.1} parent=39 // pred_fallthru
          _
        // Predicated region
        $region45: #{tpu_custom_call.1} parent=39 // pred_check
          %p282 = pneg %p90
        $region46: #{tpu_custom_call.1} parent=39 // pred_check_branch
          %284 = sbr.rel (%p282) target = $region48
        $region47: #{tpu_custom_call.1} parent=39 // pred_region
          %285 = dma.done [#allocation8], 1024
        $region48: #{tpu_custom_call.1} parent=39 // pred_fallthru
          _
        %s286 = sand.u32 %s51, 1
        %s287 = scalar_lea.sflag [#allocation5], %s286
        %s288 = sand.u32 %s51, 1
        %s289 = smul.addr %s288, 4
        %s290 = scalar_lea.vmem [#allocation4], %s289
        %p291 = pneg %p64
        %p292 = pneg %p61
        %p293 = pneg %p90
        %p294 = pneg %p87
        %p295 = scmp.lt.s32.totalorder %s29, 1
        %s296 = scalar_select %p295, %s29, 1
        %p297 = scmp.lt.s32.totalorder %s31, 0
        %s298 = scalar_select %p297, %s31, 0
        %s299 = sadd.s32 %s298, %s296
        %s300 = smul.addr %s299, 4
        %s301 = scalar_lea.vmem %s2, %s300
        %p302 = pneg %p118
        %p303 = pneg %p115
        %p304 = scmp.lt.s32.totalorder %s30, 0
        %s305 = scalar_select %p304, %s30, 0
        %s306 = scalar_lea.vmem %s3, %s305
        %p307 = pneg %p144
        %p308 = pneg %p141
        %p309 = pneg %p165
        %p310 = pneg %p162
        %p311 = pneg %p195
        %p312 = pneg %p192
        %s313 = sand.u32 %s182, 1
        %s314 = scalar_lea.sflag [#allocation6], %s313
        %s315 = sand.u32 %s182, 1
        %s316 = smul.addr %s315, 8
        %s317 = scalar_lea.vmem [#allocation9], %s316
        %p318 = scmp.lt.s32.totalorder %s29, 1
        %s319 = scalar_select %p318, %s29, 1
        %p320 = scmp.lt.s32.totalorder %s31, 0
        %s321 = scalar_select %p320, %s31, 0
        %s322 = sadd.s32 %s321, %s319
        %s323 = smul.addr %s322, 4
        %s324 = scalar_lea.vmem %s2, %s323
        %p325 = scmp.lt.s32.totalorder %s30, 0
        %s326 = scalar_select %p325, %s30, 0
        %s327 = scalar_lea.vmem %s3, %s326
        %p329 = scmp.eq.s32.totalorder %s31, 0
        // Predicated region
        $region49: #{tpu_custom_call.1} parent=39 // pred_check
          %p330 = pneg %p329
        $region50: #{tpu_custom_call.1} parent=39 // pred_check_branch
          %332 = sbr.rel (%p330) target = $region52
        $region51: #{tpu_custom_call.1} parent=39 // pred_region
          %v333 = vld [vmem:[%s277] sm:$0xf]
          %v334 = vld [vmem:[#allocation7] sm:$0xf]
          %v335 = vld [vmem:[#allocation7 + $0x4] sm:$0xf]
          %v336 = vld [vmem:[#allocation7 + $0x8] sm:$0xf]
          %v337 = vld [vmem:[#allocation7 + $0xc] sm:$0xf]
          %v338 = vld [vmem:[#allocation7 + $0x10] sm:$0xf]
          %v339 = vld [vmem:[#allocation7 + $0x14] sm:$0xf]
          %v340 = vld [vmem:[#allocation7 + $0x18] sm:$0xf]
          %v341 = vld [vmem:[#allocation7 + $0x1c] sm:$0xf]
          %v342 = vld [vmem:[#allocation7 + $0x20] sm:$0xf]
          %v343 = vld [vmem:[#allocation7 + $0x24] sm:$0xf]
          %v344 = vld [vmem:[#allocation7 + $0x28] sm:$0xf]
          %v345 = vld [vmem:[#allocation7 + $0x2c] sm:$0xf]
          %v346 = vld [vmem:[#allocation7 + $0x30] sm:$0xf]
          %v347 = vld [vmem:[#allocation7 + $0x34] sm:$0xf]
          %v348 = vld [vmem:[#allocation7 + $0x38] sm:$0xf]
          %v349 = vld [vmem:[#allocation7 + $0x3c] sm:$0xf]
          %v366 = vunpack.c.l.b16 %v334
          %v367 = vunpack.c.l.b16 %v335
          %v368 = vunpack.c.l.b16 %v336
          %v369 = vunpack.c.l.b16 %v337
          %v370 = vunpack.c.l.b16 %v338
          %v371 = vunpack.c.l.b16 %v339
          %v372 = vunpack.c.l.b16 %v340
          %v373 = vunpack.c.l.b16 %v341
          %v374 = vunpack.c.l.b16 %v342
          %v375 = vunpack.c.l.b16 %v343
          %v376 = vunpack.c.l.b16 %v344
          %v377 = vunpack.c.l.b16 %v345
          %v378 = vunpack.c.l.b16 %v346
          %v379 = vunpack.c.l.b16 %v347
          %v380 = vunpack.c.l.b16 %v348
          %v381 = vunpack.c.l.b16 %v349
          %v382 = vpack.c.b16 %v367, %v366
          %v383 = vpack.c.b16 %v369, %v368
          %v384 = vpack.c.b16 %v371, %v370
          %v385 = vpack.c.b16 %v373, %v372
          %v386 = vpack.c.b16 %v375, %v374
          %v387 = vpack.c.b16 %v377, %v376
          %v388 = vpack.c.b16 %v379, %v378
          %v389 = vpack.c.b16 %v381, %v380
          %398 = vmatprep.subr.bf16.mxu0 0
          %399 = vmatpush1.bf16.msra.mxu0 %v382
          %400 = vmatprep.subr.bf16.mxu0 0
          %401 = vmatpush1.bf16.msra.mxu0 %v383
          %402 = vmatprep.subr.bf16.mxu0 0
          %403 = vmatpush1.bf16.msra.mxu0 %v384
          %404 = vmatprep.subr.bf16.mxu0 0
          %405 = vmatpush1.bf16.msra.mxu0 %v385
          %406 = vmatprep.subr.bf16.mxu0 0
          %407 = vmatpush1.bf16.msra.mxu0 %v386
          %408 = vmatprep.subr.bf16.mxu0 0
          %409 = vmatpush1.bf16.msra.mxu0 %v387
          %410 = vmatprep.subr.bf16.mxu0 0
          %411 = vmatpush1.bf16.msra.mxu0 %v388
          %412 = vmatprep.subr.bf16.mxu0 0
          %413 = vmatpush1.bf16.msra.mxu0 %v389
          %414 = vmatprep.subr.bf16.mxu0 0
          %415 = vmatpush1.bf16.msra.mxu0 0
          %416 = vmatprep.subr.bf16.mxu0 0
          %417 = vmatpush1.bf16.msra.mxu0 0
          %418 = vmatprep.subr.bf16.mxu0 0
          %419 = vmatpush1.bf16.msra.mxu0 0
          %420 = vmatprep.subr.bf16.mxu0 0
          %421 = vmatpush1.bf16.msra.mxu0 0
          %422 = vmatprep.subr.bf16.mxu0 0
          %423 = vmatpush1.bf16.msra.mxu0 0
          %424 = vmatprep.subr.bf16.mxu0 0
          %425 = vmatpush1.bf16.msra.mxu0 0
          %426 = vmatprep.subr.bf16.mxu0 0
          %427 = vmatpush1.bf16.msra.mxu0 0
          %428 = vmatprep.subr.bf16.mxu0 0
          %429 = vmatpush1.bf16.msra.mxu0 0
          %430 = vmatprep.mubr.bf16.mxu0 0
          %431 = vmatmul.mubr.bf16.gmra.mrb[0].mxu0 %v333
          %v432 = vpop.f32.mrb[0].mxu0
          %v433 = vadd.f32 0.0, %v432
          %v434 = vpop.f32.mrb[0].mxu0
          %v435 = vpop.f32.mrb[0].mxu0
          %v436 = vpop.f32.mrb[0].mxu0
          %437 = vdwg.mxu0
          %v438 = vpack.c.bf16 %v433, %v433
          %439 = vst [vmem:[#allocation2] sm:$0xf] %v438
        $region52: #{tpu_custom_call.1} parent=39 // pred_fallthru
          _
        %v440 = vld [vmem:[%s324] sm:$0xf]
        %v441 = vld [vmem:[#allocation2] sm:$0xf]
        %v442 = vld [vmem:[%s327] sm:$0x1]
        %v444 = vlaneseq
        %v445 = vshrl.u32 %v444, 7
        %v446 = vsub.s32 0, %v445
        %v447 = vrot.slane %v442, %v446
        %vm449 = vcmask 64512
        %v451 = vsel %vm449, %v440, 0
        %vm453 = vcmask 1043456
        %v455 = vsel %vm453, %v441, 0
        %457 = vmatprep.subr.bf16.mxu0 0
        %458 = vmatpush1.bf16.msra.mxu0 %v455
        %459 = vmatprep.subr.bf16.mxu0 0
        %460 = vmatpush1.bf16.msra.mxu0 0
        %461 = vmatprep.subr.bf16.mxu0 0
        %462 = vmatpush1.bf16.msra.mxu0 0
        %463 = vmatprep.subr.bf16.mxu0 0
        %464 = vmatpush1.bf16.msra.mxu0 0
        %465 = vmatprep.subr.bf16.mxu0 0
        %466 = vmatpush1.bf16.msra.mxu0 0
        %467 = vmatprep.subr.bf16.mxu0 0
        %468 = vmatpush1.bf16.msra.mxu0 0
        %469 = vmatprep.subr.bf16.mxu0 0
        %470 = vmatpush1.bf16.msra.mxu0 0
        %471 = vmatprep.subr.bf16.mxu0 0
        %472 = vmatpush1.bf16.msra.mxu0 0
        %473 = vmatprep.subr.bf16.mxu0 0
        %474 = vmatpush1.bf16.msra.mxu0 0
        %475 = vmatprep.subr.bf16.mxu0 0
        %476 = vmatpush1.bf16.msra.mxu0 0
        %477 = vmatprep.subr.bf16.mxu0 0
        %478 = vmatpush1.bf16.msra.mxu0 0
        %479 = vmatprep.subr.bf16.mxu0 0
        %480 = vmatpush1.bf16.msra.mxu0 0
        %481 = vmatprep.subr.bf16.mxu0 0
        %482 = vmatpush1.bf16.msra.mxu0 0
        %483 = vmatprep.subr.bf16.mxu0 0
        %484 = vmatpush1.bf16.msra.mxu0 0
        %485 = vmatprep.subr.bf16.mxu0 0
        %486 = vmatpush1.bf16.msra.mxu0 0
        %487 = vmatprep.subr.bf16.mxu0 0
        %488 = vmatpush1.bf16.msra.mxu0 0
        %489 = vmatprep.mubr.bf16.mxu0 0
        %490 = vmatmul.mubr.bf16.gmra.mrb[0].mxu0 %v451
        %v491 = vpop.f32.mrb[0].mxu0
        %v492 = vadd.f32 %v447, %v491
        %v493 = vpop.f32.mrb[0].mxu0
        %v494 = vpop.f32.mrb[0].mxu0
        %v495 = vpop.f32.mrb[0].mxu0
        %496 = vdwg.mxu0
        %s497 = sld [smem:[#allocation3]]
        %vm498 = vcmp.gt.f32.partialorder %v492, 0.0
        %v499 = vstv %s497
        %v500 = vmul.f32 %v499, %v492
        %v501 = vsel %vm498, %v492, %v500
        %502 = vst [vmem:[%s317] sm:$0xff] %v501
        %s503 = sand.u32 %s182, 1
        %s504 = scalar_lea.sflag [#allocation6], %s503
        %s505 = sand.u32 %s182, 1
        %s506 = smul.addr %s505, 8
        %s507 = scalar_lea.vmem [#allocation9], %s506
        // Predicated region
        $region53: #{tpu_custom_call.1} parent=39 // pred_check
          %p508 = pneg %p192
        $region54: #{tpu_custom_call.1} parent=39 // pred_check_branch
          %510 = sbr.rel (%p508) target = $region56
        $region55: #{tpu_custom_call.1} parent=39 // pred_region
          %s512 = ssub.s32 128, 128
          %513 = vsyncadd %s504, %s512
          %s514 = sadd.s32 %s30, %s31
          %s515 = sadd.s32 %s514, %s29
          %s516 = smul.addr %s515, 128
          %s517 = scalar_lea.hbm %s5, %s516
          %s519 = sshll.u32 %s507, 4
          %s520 = int_to_ptr.vmem [resolvable:$true] %s519
          %522 = dma.vmem_to_hbm [thread:$0]  %s520, 128, %s517, %s504
        $region56: #{tpu_custom_call.1} parent=39 // pred_fallthru
          _
      $region40: #{tpu_custom_call.1} parent=5 // pred_fallthru
        _
      %p523 = scmp.le.s32.totalorder 2, %s19
      // Predicated region
      $region57: #{tpu_custom_call.1} parent=5 // pred_check
        %p524 = pneg %p523
      $region58: #{tpu_custom_call.1} parent=5 // pred_check_branch
        %526 = sbr.rel (%p524) target = $region60
      $region59: #{tpu_custom_call.1} parent=5 // pred_region
        %s527 = ssub.s32 %s19, 2
        // Predicated region
        $region61: #{tpu_custom_call.1} parent=59 // pred_check
          %p528 = pneg %p198
        $region62: #{tpu_custom_call.1} parent=59 // pred_check_branch
          %530 = sbr.rel (%p528) target = $region64
        $region63: #{tpu_custom_call.1} parent=59 // pred_region
          %s531 = sand.u32 %s183, 1
          %s532 = scalar_lea.sflag [#allocation6], %s531
          %s533 = sand.u32 %s183, 1
          %s534 = smul.addr %s533, 8
          %s535 = scalar_lea.vmem [#allocation9], %s534
          %536 = dma.done %s532, 128
        $region64: #{tpu_custom_call.1} parent=59 // pred_fallthru
          _
      $region60: #{tpu_custom_call.1} parent=5 // pred_fallthru
        _
    $region6: #{tpu_custom_call.1} parent=1 // loop_footer
      %s23 = sadd.s32 1, %s19
    $region7: #{tpu_custom_call.1} parent=1 // loop_footer_branch
      %18 = sbr.rel target = $region3
    $region8: #{tpu_custom_call.1} parent=1 // loop_exit
      _
    %537 = vsyncpa [#allocation5], 1
    %s538 = scalar_lea.sflag [#allocation5], 1
    %539 = vsyncpa %s538, 1
    %540 = vsyncpa [#allocation8], 1
    %541 = vsyncpa [#allocation6], 1
    %s542 = scalar_lea.sflag [#allocation6], 1
    %543 = vsyncpa %s542, 1

</llo_original>
